<compile_context>
chip_gen: v6e
topology: v6e:2x2x1
jax: 0.10.0
libtpu: 0.0.40
codegen_flags: <defaults>
</compile_context>

<pallas_src>
import functools

import jax
import jax.numpy as jnp
from jax.experimental import pallas as pl
from jax.experimental.pallas import tpu as pltpu


_VMEM = pl.BlockSpec(memory_space=pltpu.MemorySpace.VMEM)


def _pad_to(a, rows=None, cols=None):
    r = 0 if rows is None else rows - a.shape[0]
    c = 0 if cols is None else cols - a.shape[1]
    return jnp.pad(a, ((0, r), (0, c)))


# -------------------- fused Pallas kernel --------------------

def mynet3_2_fused_kernel(x_ref, p_ref, w_ref, o_ref, *, H, W, Cin, Cout, hidden, n_out):
    """conv1x1(+zero pad)+ReLU -> 2x2/stride-1 maxpool -> flatten -> fc1+ReLU -> fc2, fused.

    x_ref : (Nt, Cin*H*W)  raw torch-NCHW flatten of the input tile (no wrapper transpose)
    p_ref : (R, L) f32 slab: rows [0, Cin*H*W) = block-structured conv weight
            (pixel p -> lanes [p*Cout, (p+1)*Cout)), then 1 row tiled conv bias,
            1 row fc1 bias, 1 row lane-padded fc2 bias.
    w_ref : (Ho*Wo*Cout + hidden, L) bf16 slab: fc1 weight (NCHW flatten folded in), then fc2.
    o_ref : (Nt, n_out)
    """
    HW = H * W
    Ho, Wo = H + 1, W + 1
    n_flat = Ho * Wo * Cout
    cw_rows = Cin * HW
    r_bc, r_b1, r_b2 = cw_rows, cw_rows + 1, cw_rows + 2
    mxu_dtype = w_ref.dtype

    # ---- 1x1 conv + bias + ReLU as ONE MXU matmul (MXU is otherwise idle until fc1).
    # Real pixel p = h*W + w of the unpadded map lands on lanes [p*Cout, (p+1)*Cout).
    conv_all = jnp.dot(x_ref[...], p_ref[0:cw_rows, :],
                       preferred_element_type=jnp.float32)
    conv_all = jnp.maximum(conv_all + p_ref[r_bc:r_bc + 1, :], 0.0)        # (Nt, L)
    # Zero-padded border pixels of the feature map are input-independent: relu(bias).
    rb = jnp.maximum(p_ref[r_bc:r_bc + 1, 0:Cout], 0.0)                    # (1, Cout)

    def cell(i, j):   # value of the padded (Hp x Wp) feature map at (i, j)
        if 1 <= i <= H and 1 <= j <= W:
            p = (i - 1) * W + (j - 1)
            return conv_all[:, p * Cout:(p + 1) * Cout]                    # (Nt, Cout)
        return rb

    # ---- 2x2 stride-1 max pool fused directly into fc1: no lane concat; every pooled
    # (Nt, Cout) block drives an accumulating K=Cout partial matmul on the MXU.
    acc = None
    for io in range(Ho):
        for jo in range(Wo):
            m = cell(io, jo)
            for v in (cell(io, jo + 1), cell(io + 1, jo), cell(io + 1, jo + 1)):
                m = jnp.maximum(m, v)   # every window holds >=1 real pixel -> (Nt, Cout)
            idx = io * Wo + jo
            part = jnp.dot(m.astype(mxu_dtype),
                           w_ref[idx * Cout:(idx + 1) * Cout, :],
                           preferred_element_type=jnp.float32)
            acc = part if acc is None else acc + part

    h = jnp.maximum(acc + p_ref[r_b1:r_b1 + 1, :], 0.0)                    # fc1 + ReLU

    out = jnp.dot(h[:, :hidden].astype(mxu_dtype),
                  w_ref[n_flat:n_flat + hidden, :],
                  preferred_element_type=jnp.float32) + p_ref[r_b2:r_b2 + 1, :]
    # n_out (=10) < 128 lanes -> masked store; accepted knowingly at this output width.
    o_ref[...] = out[:, :n_out]


# -------------------- weight preparation (one-time, outside the hot path) --------------------

def prepare_params(params, H=2, W=2, mxu_dtype=jnp.bfloat16):
    conv_w, conv_b, fc1_w, fc1_b, fc2_w, fc2_b = params
    Cout, Cin = conv_w.shape[0], conv_w.shape[1]
    HW = H * W
    Ho, Wo = H + 1, W + 1
    hidden, n_in = fc1_w.shape
    n_out = fc2_w.shape[0]
    assert n_in == Cout * Ho * Wo, "dense block size must match pooled feature count"
    lanes = max(HW * Cout, hidden, n_out, 128)

    # --- f32 small-parameter slab: [block conv weight | tiled conv bias | fc1 bias | fc2 bias]
    wc = conv_w.reshape(Cout, Cin).T.astype(jnp.float32)                   # (Cin, Cout)
    eye = jnp.eye(HW, dtype=jnp.float32)
    # W_big[c*HW + p, q*Cout + o] = (p == q) * wc[c, o]  -> conv of every pixel in one matmul
    w_conv = jnp.einsum('pq,co->cpqo', eye, wc).reshape(Cin * HW, HW * Cout)
    pslab = jnp.concatenate([
        _pad_to(w_conv, cols=lanes),
        _pad_to(jnp.tile(conv_b.reshape(1, Cout), (1, HW)), cols=lanes),
        _pad_to(fc1_b.reshape(1, hidden), cols=lanes),
        _pad_to(fc2_b.reshape(1, n_out), cols=lanes),
    ], axis=0).astype(jnp.float32)
    pslab = _pad_to(pslab, rows=pl.cdiv(pslab.shape[0], 8) * 8)

    # --- bf16 MXU weight slab: fc1 (with torch's NCHW flatten permutation folded into the rows
    # so the kernel's (i, j, c)-ordered pooled blocks match), then lane-padded fc2.
    w1t = fc1_w.T.reshape(Cout, Ho, Wo, hidden)                            # rows indexed (c, i, j)
    w1f = jnp.transpose(w1t, (1, 2, 0, 3)).reshape(Ho * Wo * Cout, hidden)
    wslab = jnp.concatenate([_pad_to(w1f, cols=lanes),
                             _pad_to(fc2_w.T, cols=lanes)], axis=0)
    wslab = _pad_to(wslab, rows=pl.cdiv(wslab.shape[0], 16) * 16).astype(mxu_dtype)

    dims = (H, W, Cin, Cout, hidden, n_out)
    return pslab, wslab, dims


# -------------------- wrapper --------------------

def mynet3_2_forward(x, prepared, *, block_n=256):
    """x: (N, Cin, H, W) NCHW float32 (H=W=2 for the reference module)."""
    pslab, wslab, dims = prepared
    H, W, Cin, Cout, hidden, n_out = dims
    N = x.shape[0]
    assert x.shape[1:] == (Cin, H, W), x.shape
    assert x.dtype == jnp.float32, x.dtype

    # Raw NCHW flatten only (contiguous -> free); all layout bookkeeping lives in the kernel.
    x_flat = x.reshape(N, Cin * H * W)

    kernel = functools.partial(mynet3_2_fused_kernel,
                               H=H, W=W, Cin=Cin, Cout=Cout, hidden=hidden, n_out=n_out)

    n_flat = (H + 1) * (W + 1) * Cout
    lanes = pslab.shape[1]
    cost = pl.CostEstimate(
        flops=int(2 * N * (Cin * H * W * lanes + n_flat * lanes + hidden * lanes)),
        transcendentals=0,
        bytes_accessed=int(x_flat.size * 4 + pslab.size * pslab.dtype.itemsize
                           + wslab.size * wslab.dtype.itemsize + N * n_out * 4))

    if N <= block_n:
        # Tiny batch: gridless single shot -> exactly 3 input DMAs, minimal fixed cost.
        return pl.pallas_call(
            kernel,
            out_shape=jax.ShapeDtypeStruct((N, n_out), jnp.float32),
            in_specs=[_VMEM, _VMEM, _VMEM],
            out_specs=_VMEM,
            cost_estimate=cost,
        )(x_flat, pslab, wslab)

    # Large batch: tile N behind a "parallel" grid axis (megacore split on v7x); weight slabs
    # use constant index_maps so they stay VMEM-resident across grid steps.  Per-step tiles are
    # < 1 MiB, comfortably inside v7x's 64 MiB VMEM / default scoped limit.
    assert N % block_n == 0, "pad the batch to a multiple of block_n"
    return pl.pallas_call(
        kernel,
        out_shape=jax.ShapeDtypeStruct((N, n_out), jnp.float32),
        grid=(N // block_n,),
        in_specs=[
            pl.BlockSpec((block_n, Cin * H * W), lambda i: (i, 0)),
            pl.BlockSpec(pslab.shape, lambda i: (0, 0)),
            pl.BlockSpec(wslab.shape, lambda i: (0, 0)),
        ],
        out_specs=pl.BlockSpec((block_n, n_out), lambda i: (i, 0)),
        compiler_params=pltpu.CompilerParams(dimension_semantics=("parallel",)),
        cost_estimate=cost,
    )(x_flat, pslab, wslab)


# -------------------- pure-JAX reference (for verification) --------------------

def mynet3_2_reference(x, params):
    conv_w, conv_b, fc1_w, fc1_b, fc2_w, fc2_b = params
    N, Cin, H, W = x.shape
    Cout = conv_w.shape[0]
    xp = jnp.pad(x, ((0, 0), (0, 0), (1, 1), (1, 1)))
    conv = jnp.einsum('nchw,oc->nohw', xp, conv_w.reshape(Cout, Cin)) + conv_b[None, :, None, None]
    conv = jnp.maximum(conv, 0.0)
    Ho, Wo = H + 1, W + 1
    pooled = jnp.maximum(
        jnp.maximum(conv[:, :, :Ho, :Wo], conv[:, :, :Ho, 1:Wo + 1]),
        jnp.maximum(conv[:, :, 1:Ho + 1, :Wo], conv[:, :, 1:Ho + 1, 1:Wo + 1]),
    )
    flat = pooled.reshape(N, -1)
    h = jnp.maximum(flat @ fc1_w.T + fc1_b, 0.0)
    return h @ fc2_w.T + fc2_b


# -------------------- main --------------------

if __name__ == "__main__":
    key = jax.random.PRNGKey(0)
    k_x, k_cw, k_cb, k_w1, k_b1, k_w2, k_b2, k_xb = jax.random.split(key, 8)

    # Input implied by the module: (N, 3, 2, 2)
    x = jax.random.normal(k_x, (2, 3, 2, 2), dtype=jnp.float32)

    # Deterministic synthetic parameters (shapes from __init__)
    conv_w = jax.random.normal(k_cw, (32, 3, 1, 1), dtype=jnp.float32) * 0.2
    conv_b = jax.random.normal(k_cb, (32,), dtype=jnp.float32) * 0.1
    fc1_w = jax.random.normal(k_w1, (128, 288), dtype=jnp.float32) * 0.05
    fc1_b = jax.random.normal(k_b1, (128,), dtype=jnp.float32) * 0.1
    fc2_w = jax.random.normal(k_w2, (10, 128), dtype=jnp.float32) * 0.05
    fc2_b = jax.random.normal(k_b2, (10,), dtype=jnp.float32) * 0.1
    params = (conv_w, conv_b, fc1_w, fc1_b, fc2_w, fc2_b)

    prepared = prepare_params(params, H=2, W=2)

    # --- module-implied tiny batch: gridless single-shot path (bf16 MXU weights -> loose tol)
    out = jax.block_until_ready(mynet3_2_forward(x, prepared))
    ref = mynet3_2_reference(x, params)
    assert out.shape == (2, 10), out.shape
    assert jnp.allclose(out, ref, rtol=2e-2, atol=3e-2), (out, ref)

    # --- larger batch: exercises the "parallel" batch-grid path (weights VMEM-resident)
    xb = jax.random.normal(k_xb, (512, 3, 2, 2), dtype=jnp.float32)
    out_b = jax.block_until_ready(mynet3_2_forward(xb, prepared, block_n=256))
    ref_b = mynet3_2_reference(xb, params)
    assert out_b.shape == (512, 10), out_b.shape
    assert jnp.allclose(out_b, ref_b, rtol=2e-2, atol=3e-2), \
        float(jnp.max(jnp.abs(out_b - ref_b)))

    print("KERNEL_OK")
</pallas_src>

<mosaic_0001>
module attributes {stable_mosaic.version = 11 : i64} {
  func.func @mynet3_2_fused_kernel(%arg0: memref<2x12xf32, #tpu.memory_space<vmem>>, %arg1: memref<16x128xf32, #tpu.memory_space<vmem>>, %arg2: memref<416x128xbf16, #tpu.memory_space<vmem>>, %arg3: memref<2x10xf32, #tpu.memory_space<vmem>>) attributes {dimension_semantics = [], scalar_prefetch = 0 : i64, scratch_operands = 0 : i64, tpu.core_type = #tpu.core_type<tc>} {
    %c0 = arith.constant 0 : index
    %c0_0 = arith.constant 0 : index
    %0 = vector.load %arg0[%c0, %c0_0] : memref<2x12xf32, #tpu.memory_space<vmem>>, vector<2x12xf32>
    %c0_1 = arith.constant 0 : index
    %c0_2 = arith.constant 0 : index
    %1 = vector.load %arg1[%c0_1, %c0_2] : memref<16x128xf32, #tpu.memory_space<vmem>>, vector<12x128xf32>
    %cst = arith.constant dense<0.000000e+00> : vector<2x128xf32>
    %2 = tpu.matmul %0, %1, %cst {dimension_numbers = #tpu.dot_dimension_numbers<[1], [0], [0], [1], [0, 0, 1, 1], [], []>} : vector<2x12xf32>, vector<12x128xf32>, vector<2x128xf32> -> vector<2x128xf32>
    %c12 = arith.constant 12 : index
    %c0_3 = arith.constant 0 : index
    %3 = vector.load %arg1[%c12, %c0_3] : memref<16x128xf32, #tpu.memory_space<vmem>>, vector<1x128xf32>
    %4 = vector.broadcast %3 : vector<1x128xf32> to vector<2x128xf32>
    %5 = arith.addf %2, %4 : vector<2x128xf32>
    %cst_4 = arith.constant 0.000000e+00 : f32
    %6 = vector.broadcast %cst_4 : f32 to vector<2x128xf32>
    %7 = arith.maximumf %5, %6 : vector<2x128xf32>
    %c12_5 = arith.constant 12 : index
    %c0_6 = arith.constant 0 : index
    %8 = vector.load %arg1[%c12_5, %c0_6] : memref<16x128xf32, #tpu.memory_space<vmem>>, vector<1x32xf32>
    %cst_7 = arith.constant 0.000000e+00 : f32
    %9 = vector.broadcast %cst_7 : f32 to vector<1x32xf32>
    %10 = arith.maximumf %8, %9 : vector<1x32xf32>
    %11 = vector.extract_strided_slice %7 {offsets = [0, 0], sizes = [2, 32], strides = [1, 1]} : vector<2x128xf32> to vector<2x32xf32>
    %12 = arith.maximumf %10, %10 : vector<1x32xf32>
    %13 = arith.maximumf %12, %10 : vector<1x32xf32>
    %14 = vector.broadcast %13 : vector<1x32xf32> to vector<2x32xf32>
    %15 = arith.maximumf %14, %11 : vector<2x32xf32>
    %16 = arith.truncf %15 : vector<2x32xf32> to vector<2x32xbf16>
    %c0_8 = arith.constant 0 : index
    %c0_9 = arith.constant 0 : index
    %17 = vector.load %arg2[%c0_8, %c0_9] : memref<416x128xbf16, #tpu.memory_space<vmem>>, vector<32x128xbf16>
    %cst_10 = arith.constant dense<0.000000e+00> : vector<2x128xf32>
    %18 = tpu.matmul %16, %17, %cst_10 {dimension_numbers = #tpu.dot_dimension_numbers<[1], [0], [0], [1], [0, 0, 1, 1], [], []>} : vector<2x32xbf16>, vector<32x128xbf16>, vector<2x128xf32> -> vector<2x128xf32>
    %19 = vector.extract_strided_slice %7 {offsets = [0, 0], sizes = [2, 32], strides = [1, 1]} : vector<2x128xf32> to vector<2x32xf32>
    %20 = vector.extract_strided_slice %7 {offsets = [0, 32], sizes = [2, 32], strides = [1, 1]} : vector<2x128xf32> to vector<2x32xf32>
    %21 = arith.maximumf %10, %10 : vector<1x32xf32>
    %22 = vector.broadcast %21 : vector<1x32xf32> to vector<2x32xf32>
    %23 = arith.maximumf %22, %19 : vector<2x32xf32>
    %24 = arith.maximumf %23, %20 : vector<2x32xf32>
    %25 = arith.truncf %24 : vector<2x32xf32> to vector<2x32xbf16>
    %c32 = arith.constant 32 : index
    %c0_11 = arith.constant 0 : index
    %26 = vector.load %arg2[%c32, %c0_11] : memref<416x128xbf16, #tpu.memory_space<vmem>>, vector<32x128xbf16>
    %cst_12 = arith.constant dense<0.000000e+00> : vector<2x128xf32>
    %27 = tpu.matmul %25, %26, %cst_12 {dimension_numbers = #tpu.dot_dimension_numbers<[1], [0], [0], [1], [0, 0, 1, 1], [], []>} : vector<2x32xbf16>, vector<32x128xbf16>, vector<2x128xf32> -> vector<2x128xf32>
    %28 = arith.addf %18, %27 : vector<2x128xf32>
    %29 = vector.extract_strided_slice %7 {offsets = [0, 32], sizes = [2, 32], strides = [1, 1]} : vector<2x128xf32> to vector<2x32xf32>
    %30 = arith.maximumf %10, %10 : vector<1x32xf32>
    %31 = vector.broadcast %30 : vector<1x32xf32> to vector<2x32xf32>
    %32 = arith.maximumf %31, %29 : vector<2x32xf32>
    %33 = vector.broadcast %10 : vector<1x32xf32> to vector<2x32xf32>
    %34 = arith.maximumf %32, %33 : vector<2x32xf32>
    %35 = arith.truncf %34 : vector<2x32xf32> to vector<2x32xbf16>
    %c64 = arith.constant 64 : index
    %c0_13 = arith.constant 0 : index
    %36 = vector.load %arg2[%c64, %c0_13] : memref<416x128xbf16, #tpu.memory_space<vmem>>, vector<32x128xbf16>
    %cst_14 = arith.constant dense<0.000000e+00> : vector<2x128xf32>
    %37 = tpu.matmul %35, %36, %cst_14 {dimension_numbers = #tpu.dot_dimension_numbers<[1], [0], [0], [1], [0, 0, 1, 1], [], []>} : vector<2x32xbf16>, vector<32x128xbf16>, vector<2x128xf32> -> vector<2x128xf32>
    %38 = arith.addf %28, %37 : vector<2x128xf32>
    %39 = vector.extract_strided_slice %7 {offsets = [0, 0], sizes = [2, 32], strides = [1, 1]} : vector<2x128xf32> to vector<2x32xf32>
    %40 = vector.extract_strided_slice %7 {offsets = [0, 64], sizes = [2, 32], strides = [1, 1]} : vector<2x128xf32> to vector<2x32xf32>
    %41 = vector.broadcast %10 : vector<1x32xf32> to vector<2x32xf32>
    %42 = arith.maximumf %41, %39 : vector<2x32xf32>
    %43 = vector.broadcast %10 : vector<1x32xf32> to vector<2x32xf32>
    %44 = arith.maximumf %42, %43 : vector<2x32xf32>
    %45 = arith.maximumf %44, %40 : vector<2x32xf32>
    %46 = arith.truncf %45 : vector<2x32xf32> to vector<2x32xbf16>
    %c96 = arith.constant 96 : index
    %c0_15 = arith.constant 0 : index
    %47 = vector.load %arg2[%c96, %c0_15] : memref<416x128xbf16, #tpu.memory_space<vmem>>, vector<32x128xbf16>
    %cst_16 = arith.constant dense<0.000000e+00> : vector<2x128xf32>
    %48 = tpu.matmul %46, %47, %cst_16 {dimension_numbers = #tpu.dot_dimension_numbers<[1], [0], [0], [1], [0, 0, 1, 1], [], []>} : vector<2x32xbf16>, vector<32x128xbf16>, vector<2x128xf32> -> vector<2x128xf32>
    %49 = arith.addf %38, %48 : vector<2x128xf32>
    %50 = vector.extract_strided_slice %7 {offsets = [0, 0], sizes = [2, 32], strides = [1, 1]} : vector<2x128xf32> to vector<2x32xf32>
    %51 = vector.extract_strided_slice %7 {offsets = [0, 32], sizes = [2, 32], strides = [1, 1]} : vector<2x128xf32> to vector<2x32xf32>
    %52 = vector.extract_strided_slice %7 {offsets = [0, 64], sizes = [2, 32], strides = [1, 1]} : vector<2x128xf32> to vector<2x32xf32>
    %53 = vector.extract_strided_slice %7 {offsets = [0, 96], sizes = [2, 32], strides = [1, 1]} : vector<2x128xf32> to vector<2x32xf32>
    %54 = arith.maximumf %50, %51 : vector<2x32xf32>
    %55 = arith.maximumf %54, %52 : vector<2x32xf32>
    %56 = arith.maximumf %55, %53 : vector<2x32xf32>
    %57 = arith.truncf %56 : vector<2x32xf32> to vector<2x32xbf16>
    %c128 = arith.constant 128 : index
    %c0_17 = arith.constant 0 : index
    %58 = vector.load %arg2[%c128, %c0_17] : memref<416x128xbf16, #tpu.memory_space<vmem>>, vector<32x128xbf16>
    %cst_18 = arith.constant dense<0.000000e+00> : vector<2x128xf32>
    %59 = tpu.matmul %57, %58, %cst_18 {dimension_numbers = #tpu.dot_dimension_numbers<[1], [0], [0], [1], [0, 0, 1, 1], [], []>} : vector<2x32xbf16>, vector<32x128xbf16>, vector<2x128xf32> -> vector<2x128xf32>
    %60 = arith.addf %49, %59 : vector<2x128xf32>
    %61 = vector.extract_strided_slice %7 {offsets = [0, 32], sizes = [2, 32], strides = [1, 1]} : vector<2x128xf32> to vector<2x32xf32>
    %62 = vector.extract_strided_slice %7 {offsets = [0, 96], sizes = [2, 32], strides = [1, 1]} : vector<2x128xf32> to vector<2x32xf32>
    %63 = vector.broadcast %10 : vector<1x32xf32> to vector<2x32xf32>
    %64 = arith.maximumf %61, %63 : vector<2x32xf32>
    %65 = arith.maximumf %64, %62 : vector<2x32xf32>
    %66 = vector.broadcast %10 : vector<1x32xf32> to vector<2x32xf32>
    %67 = arith.maximumf %65, %66 : vector<2x32xf32>
    %68 = arith.truncf %67 : vector<2x32xf32> to vector<2x32xbf16>
    %c160 = arith.constant 160 : index
    %c0_19 = arith.constant 0 : index
    %69 = vector.load %arg2[%c160, %c0_19] : memref<416x128xbf16, #tpu.memory_space<vmem>>, vector<32x128xbf16>
    %cst_20 = arith.constant dense<0.000000e+00> : vector<2x128xf32>
    %70 = tpu.matmul %68, %69, %cst_20 {dimension_numbers = #tpu.dot_dimension_numbers<[1], [0], [0], [1], [0, 0, 1, 1], [], []>} : vector<2x32xbf16>, vector<32x128xbf16>, vector<2x128xf32> -> vector<2x128xf32>
    %71 = arith.addf %60, %70 : vector<2x128xf32>
    %72 = vector.extract_strided_slice %7 {offsets = [0, 64], sizes = [2, 32], strides = [1, 1]} : vector<2x128xf32> to vector<2x32xf32>
    %73 = vector.broadcast %10 : vector<1x32xf32> to vector<2x32xf32>
    %74 = arith.maximumf %73, %72 : vector<2x32xf32>
    %75 = vector.broadcast %10 : vector<1x32xf32> to vector<2x32xf32>
    %76 = arith.maximumf %74, %75 : vector<2x32xf32>
    %77 = vector.broadcast %10 : vector<1x32xf32> to vector<2x32xf32>
    %78 = arith.maximumf %76, %77 : vector<2x32xf32>
    %79 = arith.truncf %78 : vector<2x32xf32> to vector<2x32xbf16>
    %c192 = arith.constant 192 : index
    %c0_21 = arith.constant 0 : index
    %80 = vector.load %arg2[%c192, %c0_21] : memref<416x128xbf16, #tpu.memory_space<vmem>>, vector<32x128xbf16>
    %cst_22 = arith.constant dense<0.000000e+00> : vector<2x128xf32>
    %81 = tpu.matmul %79, %80, %cst_22 {dimension_numbers = #tpu.dot_dimension_numbers<[1], [0], [0], [1], [0, 0, 1, 1], [], []>} : vector<2x32xbf16>, vector<32x128xbf16>, vector<2x128xf32> -> vector<2x128xf32>
    %82 = arith.addf %71, %81 : vector<2x128xf32>
    %83 = vector.extract_strided_slice %7 {offsets = [0, 64], sizes = [2, 32], strides = [1, 1]} : vector<2x128xf32> to vector<2x32xf32>
    %84 = vector.extract_strided_slice %7 {offsets = [0, 96], sizes = [2, 32], strides = [1, 1]} : vector<2x128xf32> to vector<2x32xf32>
    %85 = arith.maximumf %83, %84 : vector<2x32xf32>
    %86 = vector.broadcast %10 : vector<1x32xf32> to vector<2x32xf32>
    %87 = arith.maximumf %85, %86 : vector<2x32xf32>
    %88 = vector.broadcast %10 : vector<1x32xf32> to vector<2x32xf32>
    %89 = arith.maximumf %87, %88 : vector<2x32xf32>
    %90 = arith.truncf %89 : vector<2x32xf32> to vector<2x32xbf16>
    %c224 = arith.constant 224 : index
    %c0_23 = arith.constant 0 : index
    %91 = vector.load %arg2[%c224, %c0_23] : memref<416x128xbf16, #tpu.memory_space<vmem>>, vector<32x128xbf16>
    %cst_24 = arith.constant dense<0.000000e+00> : vector<2x128xf32>
    %92 = tpu.matmul %90, %91, %cst_24 {dimension_numbers = #tpu.dot_dimension_numbers<[1], [0], [0], [1], [0, 0, 1, 1], [], []>} : vector<2x32xbf16>, vector<32x128xbf16>, vector<2x128xf32> -> vector<2x128xf32>
    %93 = arith.addf %82, %92 : vector<2x128xf32>
    %94 = vector.extract_strided_slice %7 {offsets = [0, 96], sizes = [2, 32], strides = [1, 1]} : vector<2x128xf32> to vector<2x32xf32>
    %95 = vector.broadcast %10 : vector<1x32xf32> to vector<2x32xf32>
    %96 = arith.maximumf %94, %95 : vector<2x32xf32>
    %97 = vector.broadcast %10 : vector<1x32xf32> to vector<2x32xf32>
    %98 = arith.maximumf %96, %97 : vector<2x32xf32>
    %99 = vector.broadcast %10 : vector<1x32xf32> to vector<2x32xf32>
    %100 = arith.maximumf %98, %99 : vector<2x32xf32>
    %101 = arith.truncf %100 : vector<2x32xf32> to vector<2x32xbf16>
    %c256 = arith.constant 256 : index
    %c0_25 = arith.constant 0 : index
    %102 = vector.load %arg2[%c256, %c0_25] : memref<416x128xbf16, #tpu.memory_space<vmem>>, vector<32x128xbf16>
    %cst_26 = arith.constant dense<0.000000e+00> : vector<2x128xf32>
    %103 = tpu.matmul %101, %102, %cst_26 {dimension_numbers = #tpu.dot_dimension_numbers<[1], [0], [0], [1], [0, 0, 1, 1], [], []>} : vector<2x32xbf16>, vector<32x128xbf16>, vector<2x128xf32> -> vector<2x128xf32>
    %104 = arith.addf %93, %103 : vector<2x128xf32>
    %c13 = arith.constant 13 : index
    %c0_27 = arith.constant 0 : index
    %105 = vector.load %arg1[%c13, %c0_27] : memref<16x128xf32, #tpu.memory_space<vmem>>, vector<1x128xf32>
    %106 = vector.broadcast %105 : vector<1x128xf32> to vector<2x128xf32>
    %107 = arith.addf %104, %106 : vector<2x128xf32>
    %cst_28 = arith.constant 0.000000e+00 : f32
    %108 = vector.broadcast %cst_28 : f32 to vector<2x128xf32>
    %109 = arith.maximumf %107, %108 : vector<2x128xf32>
    %110 = arith.truncf %109 : vector<2x128xf32> to vector<2x128xbf16>
    %c288 = arith.constant 288 : index
    %c0_29 = arith.constant 0 : index
    %111 = vector.load %arg2[%c288, %c0_29] : memref<416x128xbf16, #tpu.memory_space<vmem>>, vector<128x128xbf16>
    %cst_30 = arith.constant dense<0.000000e+00> : vector<2x128xf32>
    %112 = tpu.matmul %110, %111, %cst_30 {dimension_numbers = #tpu.dot_dimension_numbers<[1], [0], [0], [1], [0, 0, 1, 1], [], []>} : vector<2x128xbf16>, vector<128x128xbf16>, vector<2x128xf32> -> vector<2x128xf32>
    %c14 = arith.constant 14 : index
    %c0_31 = arith.constant 0 : index
    %113 = vector.load %arg1[%c14, %c0_31] : memref<16x128xf32, #tpu.memory_space<vmem>>, vector<1x128xf32>
    %114 = vector.broadcast %113 : vector<1x128xf32> to vector<2x128xf32>
    %115 = arith.addf %112, %114 : vector<2x128xf32>
    %116 = vector.extract_strided_slice %115 {offsets = [0, 0], sizes = [2, 10], strides = [1, 1]} : vector<2x128xf32> to vector<2x10xf32>
    %c0_32 = arith.constant 0 : index
    %c0_33 = arith.constant 0 : index
    %117 = vector.load %arg3[%c0_32, %c0_33] : memref<2x10xf32, #tpu.memory_space<vmem>>, vector<2x10xf32>
    tpu.vector_store %arg3[%c0_32, %c0_33], %116 {strides = array<i32>} : memref<2x10xf32, #tpu.memory_space<vmem>>, vector<2x10xf32>,
    return
  }
}

</mosaic_0001>

<llo_original>
// kernel: tpu_custom_call.1
$region0: #{tpu_custom_call.1}
  #allocation0 [shape = 'u32[]', space=smem, size = 0x4, offset = 0x4, fixed_abs, tag = 'smem constant byte address 0x4 - core index']
  #allocation1 [shape = 'u32[144,128]{1,0:T(1,128)}', space=vmem, size = 0x12000, scoped, tag = 'internal scratch']
  %s0 = inlined_call_operand.hbm [shape: f32[2,12], index: 0, kind: input, shape index: {}]
  %s1 = inlined_call_operand.hbm [shape: f32[16,128], index: 1, kind: input, shape index: {}]
  %s2 = inlined_call_operand.hbm [shape: bf16[416,128], index: 2, kind: input, shape index: {}]
  %s3 = inlined_call_operand.hbm [shape: f32[2,10], index: 3, kind: output, shape index: {}]
  %s4 = sld [smem:[#allocation0]]
  $region34: #{tpu_custom_call.1} parent=0
    _
  %s6 = ssub.s32 1, %s4
  %s7 = scalar_select 0, %s6, %s4
  $region1: #{tpu_custom_call.1} parent=0
    #allocation2 [shape = 'u8[1024]{0}', space=vmem, size = 0x400, scoped, tag = 'input window, operand 0, single buffered']
    #allocation3 [shape = 's32[1]{0}', space=sflag, size = 0x4, scoped, tag = 'scoped memory for tpu_custom_call.1']
    #allocation4 [shape = 's32[1]{0}', space=sflag, size = 0x4, scoped, tag = 'scoped memory for tpu_custom_call.1']
    #allocation5 [shape = 'u8[8192]{0}', space=vmem, size = 0x2000, scoped, tag = 'input window, operand 1, single buffered']
    #allocation6 [shape = 's32[1]{0}', space=sflag, size = 0x4, scoped, tag = 'scoped memory for tpu_custom_call.1']
    #allocation7 [shape = 'u8[106496]{0}', space=vmem, size = 0x1a000, scoped, tag = 'input window, operand 2, single buffered']
    #allocation8 [shape = 'u8[1024]{0}', space=vmem, size = 0x400, scoped, tag = 'output window, operand 0, single buffered']
    %8 = vsyncpa [#allocation3], 0
    %9 = vsyncpa [#allocation6], 0
    %10 = vsyncpa [#allocation4], 0
    // Predicated region
    $region2: #{tpu_custom_call.1} parent=1 // pred_check
      _
    $region3: #{tpu_custom_call.1} parent=1 // pred_check_branch
      %12 = sbr.rel (0) target = $region5
    $region4: #{tpu_custom_call.1} parent=1 // pred_region
      %s14 = ssub.s32 32, 32
      %15 = vsyncadd [#allocation3], %s14
      %s17 = sshll.u32 [#allocation2], 4
      %s18 = int_to_ptr.vmem [resolvable:$true] %s17
      %20 = dma.hbm_to_vmem [thread:$0]  %s0, 32, %s18, [#allocation3]
    $region5: #{tpu_custom_call.1} parent=1 // pred_fallthru
      _
    // Predicated region
    $region6: #{tpu_custom_call.1} parent=1 // pred_check
      _
    $region7: #{tpu_custom_call.1} parent=1 // pred_check_branch
      %22 = sbr.rel (0) target = $region9
    $region8: #{tpu_custom_call.1} parent=1 // pred_region
      %s24 = ssub.s32 256, 256
      %25 = vsyncadd [#allocation6], %s24
      %s26 = sshll.u32 [#allocation5], 4
      %s27 = int_to_ptr.vmem [resolvable:$true] %s26
      %32 = dma.hbm_to_vmem [thread:$0]  %s1, 256, %s27, [#allocation6], 128, 128, 8
    $region9: #{tpu_custom_call.1} parent=1 // pred_fallthru
      _
    // Predicated region
    $region10: #{tpu_custom_call.1} parent=1 // pred_check
      _
    $region11: #{tpu_custom_call.1} parent=1 // pred_check_branch
      %34 = sbr.rel (0) target = $region13
    $region12: #{tpu_custom_call.1} parent=1 // pred_region
      %s36 = ssub.s32 3328, 3328
      %37 = vsyncadd [#allocation6], %s36
      %s38 = sshll.u32 [#allocation7], 4
      %s39 = int_to_ptr.vmem [resolvable:$true] %s38
      %44 = dma.hbm_to_vmem [thread:$0]  %s2, 3328, %s39, [#allocation6], 64, 64, 4
    $region13: #{tpu_custom_call.1} parent=1 // pred_fallthru
      _
    // Predicated region
    $region14: #{tpu_custom_call.1} parent=1 // pred_check
      _
    $region15: #{tpu_custom_call.1} parent=1 // pred_check_branch
      %46 = sbr.rel (0) target = $region17
    $region16: #{tpu_custom_call.1} parent=1 // pred_region
      %47 = dma.done [#allocation3], 32
    $region17: #{tpu_custom_call.1} parent=1 // pred_fallthru
      _
    // Predicated region
    $region18: #{tpu_custom_call.1} parent=1 // pred_check
      _
    $region19: #{tpu_custom_call.1} parent=1 // pred_check_branch
      %49 = sbr.rel (0) target = $region21
    $region20: #{tpu_custom_call.1} parent=1 // pred_region
      %50 = dma.done [#allocation6], 256
    $region21: #{tpu_custom_call.1} parent=1 // pred_fallthru
      _
    // Predicated region
    $region22: #{tpu_custom_call.1} parent=1 // pred_check
      _
    $region23: #{tpu_custom_call.1} parent=1 // pred_check_branch
      %52 = sbr.rel (0) target = $region25
    $region24: #{tpu_custom_call.1} parent=1 // pred_region
      %53 = dma.done [#allocation6], 3328
    $region25: #{tpu_custom_call.1} parent=1 // pred_fallthru
      _
    %v55 = vld [vmem:[#allocation2] sm:$0x3]
    %v56 = vld [vmem:[#allocation5] sm:$0xff]
    %v57 = vld [vmem:[#allocation5 + $0x8] sm:$0xf]
    %v58 = vld [vmem:[#allocation5 + $0xc] sm:$0x1]
    %v59 = vlaneseq
    %v60 = vshrl.u32 %v59, 7
    %v61 = vsub.s32 0, %v60
    %v62 = vrot.slane %v58, %v61
    %vm63 = vcmask 97280
    %v65 = vsel %vm63, %v55, 0
    %vm67 = vcmask 1043456
    %v69 = vsel %vm67, %v57, 0
    %71 = vmatprep.subr.mxu0 0.0
    %72 = vmatpush1.msra.mxu0 0.0
    %73 = vmatprep.subr.mxu0 0.0
    %74 = vmatpush1.msra.mxu0 0.0
    %75 = vmatprep.subr.mxu0 0.0
    %76 = vmatpush1.msra.mxu0 0.0
    %77 = vmatprep.subr.mxu0 0.0
    %78 = vmatpush1.msra.mxu0 0.0
    %79 = vmatprep.subr.mxu0 0.0
    %80 = vmatpush1.msra.mxu0 0.0
    %81 = vmatprep.subr.mxu0 0.0
    %82 = vmatpush1.msra.mxu0 0.0
    %83 = vmatprep.subr.mxu0 0.0
    %84 = vmatpush1.msra.mxu0 0.0
    %85 = vmatprep.subr.mxu0 0.0
    %86 = vmatpush1.msra.mxu0 0.0
    %87 = vmatprep.subr.mxu0 0.0
    %88 = vmatpush1.msra.mxu0 0.0
    %89 = vmatprep.subr.mxu0 0.0
    %90 = vmatpush1.msra.mxu0 0.0
    %91 = vmatprep.subr.mxu0 0.0
    %92 = vmatpush1.msra.mxu0 0.0
    %93 = vmatprep.subr.mxu0 0.0
    %94 = vmatpush1.msra.mxu0 0.0
    %95 = vmatprep.subr.mxu0 0.0
    %96 = vmatpush1.msra.mxu0 0.0
    %97 = vmatprep.subr.mxu0 0.0
    %98 = vmatpush1.msra.mxu0 0.0
    %99 = vmatprep.subr.mxu0 0.0
    %100 = vmatpush1.msra.mxu0 %v69
    %101 = vmatprep.subr.mxu0 0.0
    %102 = vmatpush1.msra.mxu0 %v56
    %103 = vmatprep.subr.mxu0 0.0
    %104 = vmatpush2.msra.mxu0 0.0
    %105 = vmatprep.subr.mxu0 0.0
    %106 = vmatpush2.msra.mxu0 0.0
    %107 = vmatprep.subr.mxu0 0.0
    %108 = vmatpush2.msra.mxu0 0.0
    %109 = vmatprep.subr.mxu0 0.0
    %110 = vmatpush2.msra.mxu0 0.0
    %111 = vmatprep.subr.mxu0 0.0
    %112 = vmatpush2.msra.mxu0 0.0
    %113 = vmatprep.subr.mxu0 0.0
    %114 = vmatpush2.msra.mxu0 0.0
    %115 = vmatprep.subr.mxu0 0.0
    %116 = vmatpush2.msra.mxu0 0.0
    %117 = vmatprep.subr.mxu0 0.0
    %118 = vmatpush2.msra.mxu0 0.0
    %119 = vmatprep.subr.mxu0 0.0
    %120 = vmatpush2.msra.mxu0 0.0
    %121 = vmatprep.subr.mxu0 0.0
    %122 = vmatpush2.msra.mxu0 0.0
    %123 = vmatprep.subr.mxu0 0.0
    %124 = vmatpush2.msra.mxu0 0.0
    %125 = vmatprep.subr.mxu0 0.0
    %126 = vmatpush2.msra.mxu0 0.0
    %127 = vmatprep.subr.mxu0 0.0
    %128 = vmatpush2.msra.mxu0 0.0
    %129 = vmatprep.subr.mxu0 0.0
    %130 = vmatpush2.msra.mxu0 0.0
    %131 = vmatprep.subr.mxu0 0.0
    %132 = vmatpush2.msra.mxu0 0.0
    %133 = vmatprep.subr.mxu0 0.0
    %134 = vmatpush2.msra.mxu0 0.0
    %135 = vmatprep.mubr.f32.mxu0 0.0
    %136 = vmatmul.mubr.f32.gmra.mxu0 %v65
    %v137 = vpop.f32.mrf.mxu0
    %v138 = vadd.f32 %v62, %v137
    %v139 = vpop.f32.mrf.mxu0
    %140 = vdwg.mxu0
    %v141 = vmax.f32 %v138, 0.0
    %v142 = vmax.f32 %v58, 0.0
    %v143 = vlaneseq
    %v144 = vshrl.u32 %v143, 7
    %v145 = vsub.s32 0, %v144
    %v146 = vrot.slane %v142, %v145
    %v147 = vmax.f32 %v146, %v141
    %v148 = vpack.c.bf16 %v147, %v147
    %v149 = vld [vmem:[#allocation7] sm:$0xf]
    %v150 = vld [vmem:[#allocation7 + $0x4] sm:$0xf]
    %v151 = vld [vmem:[#allocation7 + $0x8] sm:$0xf]
    %v152 = vld [vmem:[#allocation7 + $0xc] sm:$0xf]
    %154 = vrot.lane.b32.xlu0 %v141, 96
    %v155 = vpop.permute.xlu0 %154
    %v157 = vmax.f32 %v147, %v155
    %v158 = vpack.c.bf16 %v157, %v157
    %v159 = vld [vmem:[#allocation7 + $0x10] sm:$0xf]
    %v160 = vld [vmem:[#allocation7 + $0x14] sm:$0xf]
    %v161 = vld [vmem:[#allocation7 + $0x18] sm:$0xf]
    %v162 = vld [vmem:[#allocation7 + $0x1c] sm:$0xf]
    %v167 = vunpack.c.l.b16 %v159
    %v168 = vunpack.c.l.b16 %v160
    %v169 = vunpack.c.l.b16 %v161
    %v170 = vunpack.c.l.b16 %v162
    %v171 = vpack.c.b16 %v168, %v167
    %v172 = vpack.c.b16 %v170, %v169
    %vm175 = vcmask 261120
    %v177 = vsel %vm175, %v158, 0
    %179 = vmatprep.subr.bf16.mxu0 0
    %180 = vmatpush1.bf16.msra.mxu0 0
    %181 = vmatprep.subr.bf16.mxu0 0
    %182 = vmatpush1.bf16.msra.mxu0 0
    %183 = vmatprep.subr.bf16.mxu0 0
    %184 = vmatpush1.bf16.msra.mxu0 0
    %185 = vmatprep.subr.bf16.mxu0 0
    %186 = vmatpush1.bf16.msra.mxu0 0
    %187 = vmatprep.subr.bf16.mxu0 0
    %188 = vmatpush1.bf16.msra.mxu0 0
    %189 = vmatprep.subr.bf16.mxu0 0
    %190 = vmatpush1.bf16.msra.mxu0 0
    %191 = vmatprep.subr.bf16.mxu0 0
    %192 = vmatpush1.bf16.msra.mxu0 %v172
    %193 = vmatprep.subr.bf16.mxu0 0
    %194 = vmatpush1.bf16.msra.mxu0 %v171
    %195 = vmatprep.subr.bf16.mxu0 0
    %196 = vmatpush2.bf16.msra.mxu0 0
    %197 = vmatprep.subr.bf16.mxu0 0
    %198 = vmatpush2.bf16.msra.mxu0 0
    %199 = vmatprep.subr.bf16.mxu0 0
    %200 = vmatpush2.bf16.msra.mxu0 0
    %201 = vmatprep.subr.bf16.mxu0 0
    %202 = vmatpush2.bf16.msra.mxu0 0
    %203 = vmatprep.subr.bf16.mxu0 0
    %204 = vmatpush2.bf16.msra.mxu0 0
    %205 = vmatprep.subr.bf16.mxu0 0
    %206 = vmatpush2.bf16.msra.mxu0 0
    %207 = vmatprep.subr.bf16.mxu0 0
    %208 = vmatpush2.bf16.msra.mxu0 0
    %209 = vmatprep.subr.bf16.mxu0 0
    %210 = vmatpush2.bf16.msra.mxu0 0
    %211 = vmatprep.mubr.bf16.mxu0 0
    %212 = vmatmul.mubr.bf16.gmra.mxu0 %v177
    %v213 = vpop.f32.mrf.mxu0
    %v214 = vadd.f32 0.0, %v213
    %v215 = vpop.f32.mrf.mxu0
    %v216 = vpop.f32.mrf.mxu0
    %v217 = vpop.f32.mrf.mxu0
    %218 = vdwg.mxu0
    %v223 = vunpack.c.l.b16 %v149
    %v224 = vunpack.c.l.b16 %v150
    %v225 = vunpack.c.l.b16 %v151
    %v226 = vunpack.c.l.b16 %v152
    %v227 = vpack.c.b16 %v224, %v223
    %v228 = vpack.c.b16 %v226, %v225
    %v232 = vsel %vm175, %v148, 0
    %234 = vmatprep.subr.bf16.mxu0 0
    %235 = vmatpush1.bf16.msra.mxu0 0
    %236 = vmatprep.subr.bf16.mxu0 0
    %237 = vmatpush1.bf16.msra.mxu0 0
    %238 = vmatprep.subr.bf16.mxu0 0
    %239 = vmatpush1.bf16.msra.mxu0 0
    %240 = vmatprep.subr.bf16.mxu0 0
    %241 = vmatpush1.bf16.msra.mxu0 0
    %242 = vmatprep.subr.bf16.mxu0 0
    %243 = vmatpush1.bf16.msra.mxu0 0
    %244 = vmatprep.subr.bf16.mxu0 0
    %245 = vmatpush1.bf16.msra.mxu0 0
    %246 = vmatprep.subr.bf16.mxu0 0
    %247 = vmatpush1.bf16.msra.mxu0 %v228
    %248 = vmatprep.subr.bf16.mxu0 0
    %249 = vmatpush1.bf16.msra.mxu0 %v227
    %250 = vmatprep.subr.bf16.mxu0 0
    %251 = vmatpush2.bf16.msra.mxu0 0
    %252 = vmatprep.subr.bf16.mxu0 0
    %253 = vmatpush2.bf16.msra.mxu0 0
    %254 = vmatprep.subr.bf16.mxu0 0
    %255 = vmatpush2.bf16.msra.mxu0 0
    %256 = vmatprep.subr.bf16.mxu0 0
    %257 = vmatpush2.bf16.msra.mxu0 0
    %258 = vmatprep.subr.bf16.mxu0 0
    %259 = vmatpush2.bf16.msra.mxu0 0
    %260 = vmatprep.subr.bf16.mxu0 0
    %261 = vmatpush2.bf16.msra.mxu0 0
    %262 = vmatprep.subr.bf16.mxu0 0
    %263 = vmatpush2.bf16.msra.mxu0 0
    %264 = vmatprep.subr.bf16.mxu0 0
    %265 = vmatpush2.bf16.msra.mxu0 0
    %266 = vmatprep.mubr.bf16.mxu0 0
    %267 = vmatmul.mubr.bf16.gmra.mxu0 %v232
    %v268 = vpop.f32.mrf.mxu0
    %v269 = vadd.f32 %v214, %v268
    %v270 = vpop.f32.mrf.mxu0
    %v271 = vpop.f32.mrf.mxu0
    %v272 = vpop.f32.mrf.mxu0
    %273 = vdwg.mxu0
    %v274 = vmax.f32 %v146, %v155
    %v275 = vmax.f32 %v274, %v146
    %v276 = vpack.c.bf16 %v275, %v275
    %v277 = vld [vmem:[#allocation7 + $0x20] sm:$0xf]
    %v278 = vld [vmem:[#allocation7 + $0x24] sm:$0xf]
    %v279 = vld [vmem:[#allocation7 + $0x28] sm:$0xf]
    %v280 = vld [vmem:[#allocation7 + $0x2c] sm:$0xf]
    %v285 = vunpack.c.l.b16 %v277
    %v286 = vunpack.c.l.b16 %v278
    %v287 = vunpack.c.l.b16 %v279
    %v288 = vunpack.c.l.b16 %v280
    %v289 = vpack.c.b16 %v286, %v285
    %v290 = vpack.c.b16 %v288, %v287
    %v294 = vsel %vm175, %v276, 0
    %296 = vmatprep.subr.bf16.mxu0 0
    %297 = vmatpush1.bf16.msra.mxu0 0
    %298 = vmatprep.subr.bf16.mxu0 0
    %299 = vmatpush1.bf16.msra.mxu0 0
    %300 = vmatprep.subr.bf16.mxu0 0
    %301 = vmatpush1.bf16.msra.mxu0 0
    %302 = vmatprep.subr.bf16.mxu0 0
    %303 = vmatpush1.bf16.msra.mxu0 0
    %304 = vmatprep.subr.bf16.mxu0 0
    %305 = vmatpush1.bf16.msra.mxu0 0
    %306 = vmatprep.subr.bf16.mxu0 0
    %307 = vmatpush1.bf16.msra.mxu0 0
    %308 = vmatprep.subr.bf16.mxu0 0
    %309 = vmatpush1.bf16.msra.mxu0 %v290
    %310 = vmatprep.subr.bf16.mxu0 0
    %311 = vmatpush1.bf16.msra.mxu0 %v289
    %312 = vmatprep.subr.bf16.mxu0 0
    %313 = vmatpush2.bf16.msra.mxu0 0
    %314 = vmatprep.subr.bf16.mxu0 0
    %315 = vmatpush2.bf16.msra.mxu0 0
    %316 = vmatprep.subr.bf16.mxu0 0
    %317 = vmatpush2.bf16.msra.mxu0 0
    %318 = vmatprep.subr.bf16.mxu0 0
    %319 = vmatpush2.bf16.msra.mxu0 0
    %320 = vmatprep.subr.bf16.mxu0 0
    %321 = vmatpush2.bf16.msra.mxu0 0
    %322 = vmatprep.subr.bf16.mxu0 0
    %323 = vmatpush2.bf16.msra.mxu0 0
    %324 = vmatprep.subr.bf16.mxu0 0
    %325 = vmatpush2.bf16.msra.mxu0 0
    %326 = vmatprep.subr.bf16.mxu0 0
    %327 = vmatpush2.bf16.msra.mxu0 0
    %328 = vmatprep.mubr.bf16.mxu0 0
    %329 = vmatmul.mubr.bf16.gmra.mxu0 %v294
    %v330 = vpop.f32.mrf.mxu0
    %v331 = vadd.f32 0.0, %v330
    %v332 = vpop.f32.mrf.mxu0
    %v333 = vpop.f32.mrf.mxu0
    %v334 = vpop.f32.mrf.mxu0
    %335 = vdwg.mxu0
    %v336 = vadd.f32 %v269, %v331
    %v337 = vmax.f32 %v147, %v146
    %338 = vrot.lane.b32.xlu0 %v141, 64
    %v339 = vpop.permute.xlu0 %338
    %v341 = vmax.f32 %v337, %v339
    %v342 = vpack.c.bf16 %v341, %v341
    %v343 = vld [vmem:[#allocation7 + $0x30] sm:$0xf]
    %v344 = vld [vmem:[#allocation7 + $0x34] sm:$0xf]
    %v345 = vld [vmem:[#allocation7 + $0x38] sm:$0xf]
    %v346 = vld [vmem:[#allocation7 + $0x3c] sm:$0xf]
    %v351 = vunpack.c.l.b16 %v343
    %v352 = vunpack.c.l.b16 %v344
    %v353 = vunpack.c.l.b16 %v345
    %v354 = vunpack.c.l.b16 %v346
    %v355 = vpack.c.b16 %v352, %v351
    %v356 = vpack.c.b16 %v354, %v353
    %v360 = vsel %vm175, %v342, 0
    %362 = vmatprep.subr.bf16.mxu0 0
    %363 = vmatpush1.bf16.msra.mxu0 0
    %364 = vmatprep.subr.bf16.mxu0 0
    %365 = vmatpush1.bf16.msra.mxu0 0
    %366 = vmatprep.subr.bf16.mxu0 0
    %367 = vmatpush1.bf16.msra.mxu0 0
    %368 = vmatprep.subr.bf16.mxu0 0
    %369 = vmatpush1.bf16.msra.mxu0 0
    %370 = vmatprep.subr.bf16.mxu0 0
    %371 = vmatpush1.bf16.msra.mxu0 0
    %372 = vmatprep.subr.bf16.mxu0 0
    %373 = vmatpush1.bf16.msra.mxu0 0
    %374 = vmatprep.subr.bf16.mxu0 0
    %375 = vmatpush1.bf16.msra.mxu0 %v356
    %376 = vmatprep.subr.bf16.mxu0 0
    %377 = vmatpush1.bf16.msra.mxu0 %v355
    %378 = vmatprep.subr.bf16.mxu0 0
    %379 = vmatpush2.bf16.msra.mxu0 0
    %380 = vmatprep.subr.bf16.mxu0 0
    %381 = vmatpush2.bf16.msra.mxu0 0
    %382 = vmatprep.subr.bf16.mxu0 0
    %383 = vmatpush2.bf16.msra.mxu0 0
    %384 = vmatprep.subr.bf16.mxu0 0
    %385 = vmatpush2.bf16.msra.mxu0 0
    %386 = vmatprep.subr.bf16.mxu0 0
    %387 = vmatpush2.bf16.msra.mxu0 0
    %388 = vmatprep.subr.bf16.mxu0 0
    %389 = vmatpush2.bf16.msra.mxu0 0
    %390 = vmatprep.subr.bf16.mxu0 0
    %391 = vmatpush2.bf16.msra.mxu0 0
    %392 = vmatprep.subr.bf16.mxu0 0
    %393 = vmatpush2.bf16.msra.mxu0 0
    %394 = vmatprep.mubr.bf16.mxu0 0
    %395 = vmatmul.mubr.bf16.gmra.mxu0 %v360
    %v396 = vpop.f32.mrf.mxu0
    %v397 = vadd.f32 0.0, %v396
    %v398 = vpop.f32.mrf.mxu0
    %v399 = vpop.f32.mrf.mxu0
    %v400 = vpop.f32.mrf.mxu0
    %401 = vdwg.mxu0
    %v402 = vadd.f32 %v336, %v397
    %v403 = vmax.f32 %v141, %v155
    %v404 = vmax.f32 %v403, %v339
    %405 = vrot.lane.b32.xlu0 %v141, 32
    %v406 = vpop.permute.xlu0 %405
    %v408 = vmax.f32 %v404, %v406
    %v409 = vpack.c.bf16 %v408, %v408
    %v410 = vld [vmem:[#allocation7 + $0x40] sm:$0xf]
    %v411 = vld [vmem:[#allocation7 + $0x44] sm:$0xf]
    %v412 = vld [vmem:[#allocation7 + $0x48] sm:$0xf]
    %v413 = vld [vmem:[#allocation7 + $0x4c] sm:$0xf]
    %v418 = vunpack.c.l.b16 %v410
    %v419 = vunpack.c.l.b16 %v411
    %v420 = vunpack.c.l.b16 %v412
    %v421 = vunpack.c.l.b16 %v413
    %v422 = vpack.c.b16 %v419, %v418
    %v423 = vpack.c.b16 %v421, %v420
    %v427 = vsel %vm175, %v409, 0
    %429 = vmatprep.subr.bf16.mxu0 0
    %430 = vmatpush1.bf16.msra.mxu0 0
    %431 = vmatprep.subr.bf16.mxu0 0
    %432 = vmatpush1.bf16.msra.mxu0 0
    %433 = vmatprep.subr.bf16.mxu0 0
    %434 = vmatpush1.bf16.msra.mxu0 0
    %435 = vmatprep.subr.bf16.mxu0 0
    %436 = vmatpush1.bf16.msra.mxu0 0
    %437 = vmatprep.subr.bf16.mxu0 0
    %438 = vmatpush1.bf16.msra.mxu0 0
    %439 = vmatprep.subr.bf16.mxu0 0
    %440 = vmatpush1.bf16.msra.mxu0 0
    %441 = vmatprep.subr.bf16.mxu0 0
    %442 = vmatpush1.bf16.msra.mxu0 %v423
    %443 = vmatprep.subr.bf16.mxu0 0
    %444 = vmatpush1.bf16.msra.mxu0 %v422
    %445 = vmatprep.subr.bf16.mxu0 0
    %446 = vmatpush2.bf16.msra.mxu0 0
    %447 = vmatprep.subr.bf16.mxu0 0
    %448 = vmatpush2.bf16.msra.mxu0 0
    %449 = vmatprep.subr.bf16.mxu0 0
    %450 = vmatpush2.bf16.msra.mxu0 0
    %451 = vmatprep.subr.bf16.mxu0 0
    %452 = vmatpush2.bf16.msra.mxu0 0
    %453 = vmatprep.subr.bf16.mxu0 0
    %454 = vmatpush2.bf16.msra.mxu0 0
    %455 = vmatprep.subr.bf16.mxu0 0
    %456 = vmatpush2.bf16.msra.mxu0 0
    %457 = vmatprep.subr.bf16.mxu0 0
    %458 = vmatpush2.bf16.msra.mxu0 0
    %459 = vmatprep.subr.bf16.mxu0 0
    %460 = vmatpush2.bf16.msra.mxu0 0
    %461 = vmatprep.mubr.bf16.mxu0 0
    %462 = vmatmul.mubr.bf16.gmra.mxu0 %v427
    %v463 = vpop.f32.mrf.mxu0
    %v464 = vadd.f32 0.0, %v463
    %v465 = vpop.f32.mrf.mxu0
    %v466 = vpop.f32.mrf.mxu0
    %v467 = vpop.f32.mrf.mxu0
    %468 = vdwg.mxu0
    %v469 = vadd.f32 %v402, %v464
    %v470 = vmax.f32 %v274, %v406
    %v471 = vmax.f32 %v470, %v146
    %v472 = vpack.c.bf16 %v471, %v471
    %v473 = vld [vmem:[#allocation7 + $0x50] sm:$0xf]
    %v474 = vld [vmem:[#allocation7 + $0x54] sm:$0xf]
    %v475 = vld [vmem:[#allocation7 + $0x58] sm:$0xf]
    %v476 = vld [vmem:[#allocation7 + $0x5c] sm:$0xf]
    %v481 = vunpack.c.l.b16 %v473
    %v482 = vunpack.c.l.b16 %v474
    %v483 = vunpack.c.l.b16 %v475
    %v484 = vunpack.c.l.b16 %v476
    %v485 = vpack.c.b16 %v482, %v481
    %v486 = vpack.c.b16 %v484, %v483
    %v490 = vsel %vm175, %v472, 0
    %492 = vmatprep.subr.bf16.mxu0 0
    %493 = vmatpush1.bf16.msra.mxu0 0
    %494 = vmatprep.subr.bf16.mxu0 0
    %495 = vmatpush1.bf16.msra.mxu0 0
    %496 = vmatprep.subr.bf16.mxu0 0
    %497 = vmatpush1.bf16.msra.mxu0 0
    %498 = vmatprep.subr.bf16.mxu0 0
    %499 = vmatpush1.bf16.msra.mxu0 0
    %500 = vmatprep.subr.bf16.mxu0 0
    %501 = vmatpush1.bf16.msra.mxu0 0
    %502 = vmatprep.subr.bf16.mxu0 0
    %503 = vmatpush1.bf16.msra.mxu0 0
    %504 = vmatprep.subr.bf16.mxu0 0
    %505 = vmatpush1.bf16.msra.mxu0 %v486
    %506 = vmatprep.subr.bf16.mxu0 0
    %507 = vmatpush1.bf16.msra.mxu0 %v485
    %508 = vmatprep.subr.bf16.mxu0 0
    %509 = vmatpush2.bf16.msra.mxu0 0
    %510 = vmatprep.subr.bf16.mxu0 0
    %511 = vmatpush2.bf16.msra.mxu0 0
    %512 = vmatprep.subr.bf16.mxu0 0
    %513 = vmatpush2.bf16.msra.mxu0 0
    %514 = vmatprep.subr.bf16.mxu0 0
    %515 = vmatpush2.bf16.msra.mxu0 0
    %516 = vmatprep.subr.bf16.mxu0 0
    %517 = vmatpush2.bf16.msra.mxu0 0
    %518 = vmatprep.subr.bf16.mxu0 0
    %519 = vmatpush2.bf16.msra.mxu0 0
    %520 = vmatprep.subr.bf16.mxu0 0
    %521 = vmatpush2.bf16.msra.mxu0 0
    %522 = vmatprep.subr.bf16.mxu0 0
    %523 = vmatpush2.bf16.msra.mxu0 0
    %524 = vmatprep.mubr.bf16.mxu0 0
    %525 = vmatmul.mubr.bf16.gmra.mxu0 %v490
    %v526 = vpop.f32.mrf.mxu0
    %v527 = vadd.f32 0.0, %v526
    %v528 = vpop.f32.mrf.mxu0
    %v529 = vpop.f32.mrf.mxu0
    %v530 = vpop.f32.mrf.mxu0
    %531 = vdwg.mxu0
    %v532 = vadd.f32 %v469, %v527
    %v533 = vmax.f32 %v146, %v339
    %v534 = vmax.f32 %v533, %v146
    %v535 = vmax.f32 %v534, %v146
    %v536 = vpack.c.bf16 %v535, %v535
    %v537 = vld [vmem:[#allocation7 + $0x60] sm:$0xf]
    %v538 = vld [vmem:[#allocation7 + $0x64] sm:$0xf]
    %v539 = vld [vmem:[#allocation7 + $0x68] sm:$0xf]
    %v540 = vld [vmem:[#allocation7 + $0x6c] sm:$0xf]
    %v545 = vunpack.c.l.b16 %v537
    %v546 = vunpack.c.l.b16 %v538
    %v547 = vunpack.c.l.b16 %v539
    %v548 = vunpack.c.l.b16 %v540
    %v549 = vpack.c.b16 %v546, %v545
    %v550 = vpack.c.b16 %v548, %v547
    %v554 = vsel %vm175, %v536, 0
    %556 = vmatprep.subr.bf16.mxu0 0
    %557 = vmatpush1.bf16.msra.mxu0 0
    %558 = vmatprep.subr.bf16.mxu0 0
    %559 = vmatpush1.bf16.msra.mxu0 0
    %560 = vmatprep.subr.bf16.mxu0 0
    %561 = vmatpush1.bf16.msra.mxu0 0
    %562 = vmatprep.subr.bf16.mxu0 0
    %563 = vmatpush1.bf16.msra.mxu0 0
    %564 = vmatprep.subr.bf16.mxu0 0
    %565 = vmatpush1.bf16.msra.mxu0 0
    %566 = vmatprep.subr.bf16.mxu0 0
    %567 = vmatpush1.bf16.msra.mxu0 0
    %568 = vmatprep.subr.bf16.mxu0 0
    %569 = vmatpush1.bf16.msra.mxu0 %v550
    %570 = vmatprep.subr.bf16.mxu0 0
    %571 = vmatpush1.bf16.msra.mxu0 %v549
    %572 = vmatprep.subr.bf16.mxu0 0
    %573 = vmatpush2.bf16.msra.mxu0 0
    %574 = vmatprep.subr.bf16.mxu0 0
    %575 = vmatpush2.bf16.msra.mxu0 0
    %576 = vmatprep.subr.bf16.mxu0 0
    %577 = vmatpush2.bf16.msra.mxu0 0
    %578 = vmatprep.subr.bf16.mxu0 0
    %579 = vmatpush2.bf16.msra.mxu0 0
    %580 = vmatprep.subr.bf16.mxu0 0
    %581 = vmatpush2.bf16.msra.mxu0 0
    %582 = vmatprep.subr.bf16.mxu0 0
    %583 = vmatpush2.bf16.msra.mxu0 0
    %584 = vmatprep.subr.bf16.mxu0 0
    %585 = vmatpush2.bf16.msra.mxu0 0
    %586 = vmatprep.subr.bf16.mxu0 0
    %587 = vmatpush2.bf16.msra.mxu0 0
    %588 = vmatprep.mubr.bf16.mxu0 0
    %589 = vmatmul.mubr.bf16.gmra.mxu0 %v554
    %v590 = vpop.f32.mrf.mxu0
    %v591 = vadd.f32 0.0, %v590
    %v592 = vpop.f32.mrf.mxu0
    %v593 = vpop.f32.mrf.mxu0
    %v594 = vpop.f32.mrf.mxu0
    %595 = vdwg.mxu0
    %v596 = vadd.f32 %v532, %v591
    %598 = vrot.lane.b32.xlu0 %v146, 64
    %v599 = vpop.permute.xlu0 %598
    %v601 = vmax.f32 %v403, %v599
    %v602 = vmax.f32 %v601, %v599
    %v603 = vpack.c.bf16 %v602, %v602
    %v604 = vld [vmem:[#allocation7 + $0x70] sm:$0xf]
    %v605 = vld [vmem:[#allocation7 + $0x74] sm:$0xf]
    %v606 = vld [vmem:[#allocation7 + $0x78] sm:$0xf]
    %v607 = vld [vmem:[#allocation7 + $0x7c] sm:$0xf]
    %609 = vrot.lane.b32.xlu0 %v603, 64
    %v610 = vpop.permute.xlu0 %609
    %v615 = vunpack.c.l.b16 %v604
    %v616 = vunpack.c.l.b16 %v605
    %v617 = vunpack.c.l.b16 %v606
    %v618 = vunpack.c.l.b16 %v607
    %v619 = vpack.c.b16 %v616, %v615
    %v620 = vpack.c.b16 %v618, %v617
    %v624 = vsel %vm175, %v610, 0
    %626 = vmatprep.subr.bf16.mxu0 0
    %627 = vmatpush1.bf16.msra.mxu0 0
    %628 = vmatprep.subr.bf16.mxu0 0
    %629 = vmatpush1.bf16.msra.mxu0 0
    %630 = vmatprep.subr.bf16.mxu0 0
    %631 = vmatpush1.bf16.msra.mxu0 0
    %632 = vmatprep.subr.bf16.mxu0 0
    %633 = vmatpush1.bf16.msra.mxu0 0
    %634 = vmatprep.subr.bf16.mxu0 0
    %635 = vmatpush1.bf16.msra.mxu0 0
    %636 = vmatprep.subr.bf16.mxu0 0
    %637 = vmatpush1.bf16.msra.mxu0 0
    %638 = vmatprep.subr.bf16.mxu0 0
    %639 = vmatpush1.bf16.msra.mxu0 %v620
    %640 = vmatprep.subr.bf16.mxu0 0
    %641 = vmatpush1.bf16.msra.mxu0 %v619
    %642 = vmatprep.subr.bf16.mxu0 0
    %643 = vmatpush2.bf16.msra.mxu0 0
    %644 = vmatprep.subr.bf16.mxu0 0
    %645 = vmatpush2.bf16.msra.mxu0 0
    %646 = vmatprep.subr.bf16.mxu0 0
    %647 = vmatpush2.bf16.msra.mxu0 0
    %648 = vmatprep.subr.bf16.mxu0 0
    %649 = vmatpush2.bf16.msra.mxu0 0
    %650 = vmatprep.subr.bf16.mxu0 0
    %651 = vmatpush2.bf16.msra.mxu0 0
    %652 = vmatprep.subr.bf16.mxu0 0
    %653 = vmatpush2.bf16.msra.mxu0 0
    %654 = vmatprep.subr.bf16.mxu0 0
    %655 = vmatpush2.bf16.msra.mxu0 0
    %656 = vmatprep.subr.bf16.mxu0 0
    %657 = vmatpush2.bf16.msra.mxu0 0
    %658 = vmatprep.mubr.bf16.mxu0 0
    %659 = vmatmul.mubr.bf16.gmra.mxu0 %v624
    %v660 = vpop.f32.mrf.mxu0
    %v661 = vadd.f32 0.0, %v660
    %v662 = vpop.f32.mrf.mxu0
    %v663 = vpop.f32.mrf.mxu0
    %v664 = vpop.f32.mrf.mxu0
    %665 = vdwg.mxu0
    %v666 = vadd.f32 %v596, %v661
    %667 = vrot.lane.b32.xlu0 %v146, 96
    %v668 = vpop.permute.xlu0 %667
    %v670 = vmax.f32 %v141, %v668
    %v671 = vmax.f32 %v670, %v668
    %v672 = vmax.f32 %v671, %v668
    %v673 = vpack.c.bf16 %v672, %v672
    %v674 = vld [vmem:[#allocation7 + $0x80] sm:$0xf]
    %v675 = vld [vmem:[#allocation7 + $0x84] sm:$0xf]
    %v676 = vld [vmem:[#allocation7 + $0x88] sm:$0xf]
    %v677 = vld [vmem:[#allocation7 + $0x8c] sm:$0xf]
    %679 = vrot.lane.b32.xlu0 %v673, 32
    %v680 = vpop.permute.xlu0 %679
    %v685 = vunpack.c.l.b16 %v674
    %v686 = vunpack.c.l.b16 %v675
    %v687 = vunpack.c.l.b16 %v676
    %v688 = vunpack.c.l.b16 %v677
    %v689 = vpack.c.b16 %v686, %v685
    %v690 = vpack.c.b16 %v688, %v687
    %v694 = vsel %vm175, %v680, 0
    %696 = vmatprep.subr.bf16.mxu0 0
    %697 = vmatpush1.bf16.msra.mxu0 0
    %698 = vmatprep.subr.bf16.mxu0 0
    %699 = vmatpush1.bf16.msra.mxu0 0
    %700 = vmatprep.subr.bf16.mxu0 0
    %701 = vmatpush1.bf16.msra.mxu0 0
    %702 = vmatprep.subr.bf16.mxu0 0
    %703 = vmatpush1.bf16.msra.mxu0 0
    %704 = vmatprep.subr.bf16.mxu0 0
    %705 = vmatpush1.bf16.msra.mxu0 0
    %706 = vmatprep.subr.bf16.mxu0 0
    %707 = vmatpush1.bf16.msra.mxu0 0
    %708 = vmatprep.subr.bf16.mxu0 0
    %709 = vmatpush1.bf16.msra.mxu0 %v690
    %710 = vmatprep.subr.bf16.mxu0 0
    %711 = vmatpush1.bf16.msra.mxu0 %v689
    %712 = vmatprep.subr.bf16.mxu0 0
    %713 = vmatpush2.bf16.msra.mxu0 0
    %714 = vmatprep.subr.bf16.mxu0 0
    %715 = vmatpush2.bf16.msra.mxu0 0
    %716 = vmatprep.subr.bf16.mxu0 0
    %717 = vmatpush2.bf16.msra.mxu0 0
    %718 = vmatprep.subr.bf16.mxu0 0
    %719 = vmatpush2.bf16.msra.mxu0 0
    %720 = vmatprep.subr.bf16.mxu0 0
    %721 = vmatpush2.bf16.msra.mxu0 0
    %722 = vmatprep.subr.bf16.mxu0 0
    %723 = vmatpush2.bf16.msra.mxu0 0
    %724 = vmatprep.subr.bf16.mxu0 0
    %725 = vmatpush2.bf16.msra.mxu0 0
    %726 = vmatprep.subr.bf16.mxu0 0
    %727 = vmatpush2.bf16.msra.mxu0 0
    %728 = vmatprep.mubr.bf16.mxu0 0
    %729 = vmatmul.mubr.bf16.gmra.mxu0 %v694
    %v730 = vpop.f32.mrf.mxu0
    %v731 = vadd.f32 0.0, %v730
    %v732 = vpop.f32.mrf.mxu0
    %v733 = vpop.f32.mrf.mxu0
    %v734 = vpop.f32.mrf.mxu0
    %735 = vdwg.mxu0
    %v736 = vadd.f32 %v666, %v731
    %v737 = vld [vmem:[#allocation5 + $0xd] sm:$0x1]
    %v738 = vlaneseq
    %v739 = vshrl.u32 %v738, 7
    %v740 = vsub.s32 0, %v739
    %v741 = vrot.slane %v737, %v740
    %v742 = vadd.f32 %v736, %v741
    %v743 = vmax.f32 %v742, 0.0
    %v744 = vpack.c.bf16 %v743, %v743
    %v745 = vld [vmem:[#allocation7 + $0x90] sm:$0xf]
    %v746 = vld [vmem:[#allocation7 + $0x94] sm:$0xf]
    %v747 = vld [vmem:[#allocation7 + $0x98] sm:$0xf]
    %v748 = vld [vmem:[#allocation7 + $0x9c] sm:$0xf]
    %v749 = vld [vmem:[#allocation7 + $0xa0] sm:$0xf]
    %v750 = vld [vmem:[#allocation7 + $0xa4] sm:$0xf]
    %v751 = vld [vmem:[#allocation7 + $0xa8] sm:$0xf]
    %v752 = vld [vmem:[#allocation7 + $0xac] sm:$0xf]
    %v753 = vld [vmem:[#allocation7 + $0xb0] sm:$0xf]
    %v754 = vld [vmem:[#allocation7 + $0xb4] sm:$0xf]
    %v755 = vld [vmem:[#allocation7 + $0xb8] sm:$0xf]
    %v756 = vld [vmem:[#allocation7 + $0xbc] sm:$0xf]
    %v757 = vld [vmem:[#allocation7 + $0xc0] sm:$0xf]
    %v758 = vld [vmem:[#allocation7 + $0xc4] sm:$0xf]
    %v759 = vld [vmem:[#allocation7 + $0xc8] sm:$0xf]
    %v760 = vld [vmem:[#allocation7 + $0xcc] sm:$0xf]
    %v761 = vld [vmem:[#allocation5 + $0xe] sm:$0x1]
    %v762 = vlaneseq
    %v763 = vshrl.u32 %v762, 7
    %v764 = vsub.s32 0, %v763
    %v765 = vrot.slane %v761, %v764
    %v782 = vunpack.c.l.b16 %v745
    %v783 = vunpack.c.l.b16 %v746
    %v784 = vunpack.c.l.b16 %v747
    %v785 = vunpack.c.l.b16 %v748
    %v786 = vunpack.c.l.b16 %v749
    %v787 = vunpack.c.l.b16 %v750
    %v788 = vunpack.c.l.b16 %v751
    %v789 = vunpack.c.l.b16 %v752
    %v790 = vunpack.c.l.b16 %v753
    %v791 = vunpack.c.l.b16 %v754
    %v792 = vunpack.c.l.b16 %v755
    %v793 = vunpack.c.l.b16 %v756
    %v794 = vunpack.c.l.b16 %v757
    %v795 = vunpack.c.l.b16 %v758
    %v796 = vunpack.c.l.b16 %v759
    %v797 = vunpack.c.l.b16 %v760
    %v798 = vpack.c.b16 %v783, %v782
    %v799 = vpack.c.b16 %v785, %v784
    %v800 = vpack.c.b16 %v787, %v786
    %v801 = vpack.c.b16 %v789, %v788
    %v802 = vpack.c.b16 %v791, %v790
    %v803 = vpack.c.b16 %v793, %v792
    %v804 = vpack.c.b16 %v795, %v794
    %v805 = vpack.c.b16 %v797, %v796
    %814 = vmatprep.subr.bf16.mxu0 0
    %815 = vmatpush1.bf16.msra.mxu0 %v805
    %816 = vmatprep.subr.bf16.mxu0 0
    %817 = vmatpush1.bf16.msra.mxu0 %v804
    %818 = vmatprep.subr.bf16.mxu0 0
    %819 = vmatpush1.bf16.msra.mxu0 %v803
    %820 = vmatprep.subr.bf16.mxu0 0
    %821 = vmatpush1.bf16.msra.mxu0 %v802
    %822 = vmatprep.subr.bf16.mxu0 0
    %823 = vmatpush1.bf16.msra.mxu0 %v801
    %824 = vmatprep.subr.bf16.mxu0 0
    %825 = vmatpush1.bf16.msra.mxu0 %v800
    %826 = vmatprep.subr.bf16.mxu0 0
    %827 = vmatpush1.bf16.msra.mxu0 %v799
    %828 = vmatprep.subr.bf16.mxu0 0
    %829 = vmatpush1.bf16.msra.mxu0 %v798
    %830 = vmatprep.subr.bf16.mxu0 0
    %831 = vmatpush2.bf16.msra.mxu0 0
    %832 = vmatprep.subr.bf16.mxu0 0
    %833 = vmatpush2.bf16.msra.mxu0 0
    %834 = vmatprep.subr.bf16.mxu0 0
    %835 = vmatpush2.bf16.msra.mxu0 0
    %836 = vmatprep.subr.bf16.mxu0 0
    %837 = vmatpush2.bf16.msra.mxu0 0
    %838 = vmatprep.subr.bf16.mxu0 0
    %839 = vmatpush2.bf16.msra.mxu0 0
    %840 = vmatprep.subr.bf16.mxu0 0
    %841 = vmatpush2.bf16.msra.mxu0 0
    %842 = vmatprep.subr.bf16.mxu0 0
    %843 = vmatpush2.bf16.msra.mxu0 0
    %844 = vmatprep.subr.bf16.mxu0 0
    %845 = vmatpush2.bf16.msra.mxu0 0
    %846 = vmatprep.mubr.bf16.mxu0 0
    %847 = vmatmul.mubr.bf16.gmra.mxu0 %v744
    %v848 = vpop.f32.mrf.mxu0
    %v849 = vadd.f32 %v765, %v848
    %v850 = vpop.f32.mrf.mxu0
    %v851 = vpop.f32.mrf.mxu0
    %v852 = vpop.f32.mrf.mxu0
    %853 = vdwg.mxu0
    %vm854 = vcmask 74752
    %855 = vst.msk [vmem:[#allocation8] sm:$0x3] %vm854, %v849
    // Predicated region
    $region26: #{tpu_custom_call.1} parent=1 // pred_check
      _
    $region27: #{tpu_custom_call.1} parent=1 // pred_check_branch
      %857 = sbr.rel (0) target = $region29
    $region28: #{tpu_custom_call.1} parent=1 // pred_region
      %s859 = ssub.s32 32, 32
      %860 = vsyncadd [#allocation4], %s859
      %s862 = sshll.u32 [#allocation8], 4
      %s863 = int_to_ptr.vmem [resolvable:$true] %s862
      %865 = dma.vmem_to_hbm [thread:$0]  %s863, 32, %s3, [#allocation4]
    $region29: #{tpu_custom_call.1} parent=1 // pred_fallthru
      _
    // Predicated region
    $region30: #{tpu_custom_call.1} parent=1 // pred_check
      _
    $region31: #{tpu_custom_call.1} parent=1 // pred_check_branch
      %867 = sbr.rel (0) target = $region33
    $region32: #{tpu_custom_call.1} parent=1 // pred_region
      %868 = dma.done [#allocation4], 32
    $region33: #{tpu_custom_call.1} parent=1 // pred_fallthru
      _
    %869 = vsyncpa [#allocation3], 1
    %870 = vsyncpa [#allocation6], 1
    %871 = vsyncpa [#allocation4], 1

</llo_original>
